<compile_context>
chip_gen: v7x
topology: tpu7x:2x2x1
jax: 0.10.0
libtpu: 0.0.40
codegen_flags: <defaults>
</compile_context>

<pallas_src>
import jax
import jax.numpy as jnp
from jax import lax
from jax.experimental import pallas as pl
from jax.experimental.pallas import tpu as pltpu

_BAYER_CHANNEL = {"R": 0, "G": 1, "B": 2}
_MIB = 1024 * 1024


def _pattern_ids(bayer_pattern: str):
    """Channel index per (row%2, col%2) position of the 2x2 Bayer cell."""
    assert len(bayer_pattern) == 4 and set(bayer_pattern) <= set("RGB"), (
        f"invalid bayer pattern: {bayer_pattern!r}"
    )
    ids = [_BAYER_CHANNEL[c] for c in bayer_pattern]
    return ids[0], ids[1], ids[2], ids[3]  # c00, c01, c10, c11


def _sublane(itemsize: int) -> int:
    return {4: 8, 2: 16, 1: 32}.get(itemsize, 8)


def _vmem_capacity_bytes() -> int:
    """Physical VMEM per core; conservative default if query unavailable."""
    try:
        info = pltpu.get_tpu_info()
        for attr in ("vmem_capacity_bytes", "vmem_bytes"):
            cap = getattr(info, attr, None)
            if cap:
                return int(cap)
    except Exception:
        pass
    return 64 * _MIB  # v7x-sized conservative default


def _budget():
    """Returns (vmem_capacity, target bytes per (th, tw) plane block)."""
    cap = _vmem_capacity_bytes()
    if cap >= 100 * _MIB:      # v5e / v6e: 128 MiB physical VMEM
        return cap, 6 * _MIB
    return cap, 3 * _MIB       # v7x: 64 MiB physical VMEM


def _tw_divisor(W: int, target: int = 2048):
    """Largest multiple of 128 that divides W and is <= target (None if none)."""
    if W < 128 or W % 128 != 0:
        return None
    t = min(W, target)
    t -= t % 128
    for cand in range(t, 127, -128):
        if W % cand == 0:
            return cand
    return None


# ----------------------------------------------------------------------------
# Fast path: row-parity split (reads only 2 of 3 channel planes).
# ----------------------------------------------------------------------------
def _make_parity_kernel(tw: int):
    def kernel(xe_ref, xo_ref, o_ref):
        # Blocks: (1, 1, th2, tw).  Tile column origin is a multiple of 128,
        # so local lane parity == global column parity.
        cols = lax.broadcasted_iota(jnp.int32, (1, 1, 1, tw), dimension=3)
        col_even = (cols & 1) == 0
        o_ref[...] = jnp.where(col_even, xe_ref[...], xo_ref[...])

    return kernel


def _mosaic_parity_split(x, bayer_pattern, cap, plane_target):
    N, _, H, W = x.shape
    itemsize = jnp.dtype(x.dtype).itemsize
    sub = _sublane(itemsize)
    c00, c01, c10, c11 = _pattern_ids(bayer_pattern)

    H2 = H // 2
    tw = _tw_divisor(W)
    assert tw is not None

    # Row-tile sized from the per-plane VMEM budget.
    target_elems = max(1, plane_target // itemsize)
    th2 = target_elems // tw
    if th2 >= H2:
        th2 = H2
    else:
        th2 = max(sub, (th2 // sub) * sub)

    def nsteps(th2_, tw_):
        return N * 2 * pl.cdiv(H2, th2_) * (W // tw_)

    # Guarantee enough grid steps for megacore sharding + DMA/compute overlap.
    for _ in range(16):
        if nsteps(th2, tw) >= 8:
            break
        new_th2 = max(sub, ((th2 // 2) // sub) * sub)
        if new_th2 < th2:
            th2 = new_th2
            continue
        if tw % 256 == 0 and W % (tw // 2) == 0:
            tw //= 2
            continue
        break

    Wb = W // tw                       # column blocks per row-parity half
    grid = (N, 2, pl.cdiv(H2, th2), Wb)

    # Free reshape: super-row r holds original rows (2r, 2r+1) back to back,
    # so even rows live in [0, W) and odd rows in [W, 2W) of the last axis.
    x_r = x.reshape(N, 3, H2, 2 * W)

    in_spec_e = pl.BlockSpec(          # channel used at even columns
        (1, 1, th2, tw),
        lambda n, p, i, j: (n, c00 + p * (c10 - c00), i, j + p * Wb),
    )
    in_spec_o = pl.BlockSpec(          # channel used at odd columns
        (1, 1, th2, tw),
        lambda n, p, i, j: (n, c01 + p * (c11 - c01), i, j + p * Wb),
    )
    out_spec = pl.BlockSpec(
        (1, 1, th2, tw),
        lambda n, p, i, j: (n, 0, i, j + p * Wb),
    )

    footprint = 3 * 2 * th2 * tw * itemsize     # (2 in + 1 out) double-buffered
    vmem_limit = int(max(32 * _MIB, footprint + 16 * _MIB))

    out_r = pl.pallas_call(
        _make_parity_kernel(tw),
        out_shape=jax.ShapeDtypeStruct((N, 1, H2, 2 * W), x.dtype),
        grid=grid,
        in_specs=[in_spec_e, in_spec_o],
        out_specs=out_spec,
        compiler_params=pltpu.CompilerParams(
            dimension_semantics=("parallel", "parallel", "parallel", "parallel"),
            vmem_limit_bytes=vmem_limit,
        ),
    )(x_r, x_r)

    return out_r.reshape(N, 1, H, W)


# ----------------------------------------------------------------------------
# General fallback (odd H, or W not a multiple of 128): 3-plane read.
# ----------------------------------------------------------------------------
def _make_fallback_kernel(bayer_pattern: str, th: int, tw: int):
    c00, c01, c10, c11 = _pattern_ids(bayer_pattern)

    def kernel(x_ref, o_ref):
        # x_ref: (nb, 3, th, tw); o_ref: (nb, 1, th, tw).  Tile origins are
        # always even (th multiple of sublane or full H, tw multiple of 128 or
        # full W), so local parity == global parity.  Masks are broadcastable
        # 1-D iotas, not full-tile temporaries.
        rows = lax.broadcasted_iota(jnp.int32, (1, th, 1), dimension=1)
        cols = lax.broadcasted_iota(jnp.int32, (1, 1, tw), dimension=2)
        row_even = (rows & 1) == 0
        col_even = (cols & 1) == 0
        top = jnp.where(col_even, x_ref[:, c00, :, :], x_ref[:, c01, :, :])
        bot = jnp.where(col_even, x_ref[:, c10, :, :], x_ref[:, c11, :, :])
        o_ref[:, 0, :, :] = jnp.where(row_even, top, bot)

    return kernel


def _mosaic_general(x, bayer_pattern, cap, plane_target):
    N, C, H, W = x.shape
    itemsize = jnp.dtype(x.dtype).itemsize
    sub = _sublane(itemsize)

    # Lane-dense width tiles; ragged last block is padded/masked by Pallas.
    if W <= 1536:
        tw = W                                  # full-dim exception
    else:
        nblk = pl.cdiv(W, 1024)
        tw = ((pl.cdiv(W, nblk) + 127) // 128) * 128

    target_elems = max(1, plane_target // itemsize)
    th = target_elems // max(tw, 1)
    if th >= H:
        th = H
    else:
        th = max(sub, (th // sub) * sub)

    # Tiny-problem path: fold the whole batch into one block to amortize the
    # per-grid-step overhead.
    total_bytes = N * C * H * W * itemsize
    nb = N if total_bytes <= 2 * _MIB else 1

    grid = (N // nb, pl.cdiv(H, th), pl.cdiv(W, tw))

    footprint = nb * (3 + 1) * 2 * th * tw * itemsize
    vmem_limit = int(max(32 * _MIB, footprint + 16 * _MIB))

    return pl.pallas_call(
        _make_fallback_kernel(bayer_pattern, th, tw),
        out_shape=jax.ShapeDtypeStruct((N, 1, H, W), x.dtype),
        grid=grid,
        in_specs=[pl.BlockSpec((nb, 3, th, tw), lambda n, i, j: (n, 0, i, j))],
        out_specs=pl.BlockSpec((nb, 1, th, tw), lambda n, i, j: (n, 0, i, j)),
        compiler_params=pltpu.CompilerParams(
            dimension_semantics=("parallel", "parallel", "parallel"),
            vmem_limit_bytes=vmem_limit,
        ),
    )(x)


def demosaicing_forward(x: jnp.ndarray, bayer_pattern: str = "RGGB") -> jnp.ndarray:
    """Pallas equivalent of Demosaicing(bayer_pattern).forward(x) for NCHW x."""
    N, C, H, W = x.shape
    assert C == 3, "Demosaicing forward (mosaicing) expects an RGB input"
    cap, plane_target = _budget()
    if H % 2 == 0 and W >= 128 and W % 128 == 0:
        return _mosaic_parity_split(x, bayer_pattern, cap, plane_target)
    return _mosaic_general(x, bayer_pattern, cap, plane_target)


# ----------------------------------------------------------------------------
# Pure-JAX reference + self-test
# ----------------------------------------------------------------------------
def _reference(x: jnp.ndarray, bayer_pattern: str) -> jnp.ndarray:
    N, C, H, W = x.shape
    ch = jnp.array(
        [_BAYER_CHANNEL[c] for c in bayer_pattern], dtype=jnp.int32
    ).reshape(2, 2)
    yy = jnp.arange(H) % 2
    xx = jnp.arange(W) % 2
    sel = ch[yy[:, None], xx[None, :]]                 # (H, W) channel per pixel
    mask = (jnp.arange(3)[:, None, None] == sel[None, :, :]).astype(x.dtype)
    return jnp.sum(x * mask[None], axis=1, keepdims=True)


if __name__ == "__main__":
    key = jax.random.PRNGKey(0)
    cases = [
        ((2, 3, 16, 16), "RGGB"),    # tiny, W not multiple of 128 -> fallback path
        ((1, 3, 128, 256), "GRBG"),  # parity-split (2-plane read) path
        ((1, 3, 144, 256), "BGGR"),  # parity path with ragged row tiling
    ]
    for idx, (shape, pattern) in enumerate(cases):
        k = jax.random.fold_in(key, idx)
        x = jax.random.normal(k, shape, dtype=jnp.float32)
        out = jax.block_until_ready(demosaicing_forward(x, pattern))
        ref = _reference(x, pattern)
        assert out.shape == (shape[0], 1, shape[2], shape[3])
        assert jnp.allclose(out, ref, atol=1e-6, rtol=1e-6), (
            f"mismatch for shape={shape} pattern={pattern}"
        )
    print("KERNEL_OK")
</pallas_src>

<mosaic_0001>
module attributes {stable_mosaic.version = 11 : i64} {
  func.func @kernel(%arg0: i32, %arg1: i32, %arg2: i32, %arg3: memref<2x3x16x16xf32, #tpu.memory_space<vmem>>, %arg4: memref<2x1x16x16xf32, #tpu.memory_space<vmem>>) attributes {dimension_semantics = [#tpu.dimension_semantics<parallel>, #tpu.dimension_semantics<parallel>, #tpu.dimension_semantics<parallel>], iteration_bounds = array<i64: 1, 1, 1>, scalar_prefetch = 0 : i64, scratch_operands = 0 : i64, tpu.core_type = #tpu.core_type<tc>, window_params = [{transform_indices = @transform_0, window_bounds = array<i64: 2, 3, 16, 16>}, {transform_indices = @transform_1, window_bounds = array<i64: 2, 1, 16, 16>}]} {
    %0 = tpu.iota {dimensions = array<i32: 1>} : vector<1x16x1xi32>
    %1 = tpu.iota {dimensions = array<i32: 2>} : vector<1x1x16xi32>
    %c1_i32 = arith.constant 1 : i32
    %2 = vector.broadcast %c1_i32 : i32 to vector<1x16x1xi32>
    %3 = arith.andi %0, %2 : vector<1x16x1xi32>
    %c0_i32 = arith.constant 0 : i32
    %4 = vector.broadcast %c0_i32 : i32 to vector<1x16x1xi32>
    %5 = arith.cmpi eq, %3, %4 : vector<1x16x1xi32>
    %c1_i32_0 = arith.constant 1 : i32
    %6 = vector.broadcast %c1_i32_0 : i32 to vector<1x1x16xi32>
    %7 = arith.andi %1, %6 : vector<1x1x16xi32>
    %c0_i32_1 = arith.constant 0 : i32
    %8 = vector.broadcast %c0_i32_1 : i32 to vector<1x1x16xi32>
    %9 = arith.cmpi eq, %7, %8 : vector<1x1x16xi32>
    %c0 = arith.constant 0 : index
    %c0_2 = arith.constant 0 : index
    %c0_3 = arith.constant 0 : index
    %c0_4 = arith.constant 0 : index
    %10 = vector.load %arg3[%c0, %c0_2, %c0_3, %c0_4] : memref<2x3x16x16xf32, #tpu.memory_space<vmem>>, vector<2x1x16x16xf32>
    %11 = vector.shape_cast %10 : vector<2x1x16x16xf32> to vector<2x16x16xf32>
    %c0_5 = arith.constant 0 : index
    %c1 = arith.constant 1 : index
    %c0_6 = arith.constant 0 : index
    %c0_7 = arith.constant 0 : index
    %12 = vector.load %arg3[%c0_5, %c1, %c0_6, %c0_7] : memref<2x3x16x16xf32, #tpu.memory_space<vmem>>, vector<2x1x16x16xf32>
    %13 = vector.shape_cast %12 : vector<2x1x16x16xf32> to vector<2x16x16xf32>
    %14 = vector.shape_cast %9 : vector<1x1x16xi1> to vector<1x1x16xi1>
    %15 = vector.broadcast %14 : vector<1x1x16xi1> to vector<2x16x16xi1>
    %16 = arith.select %15, %11, %13 : vector<2x16x16xi1>, vector<2x16x16xf32>
    %c0_8 = arith.constant 0 : index
    %c1_9 = arith.constant 1 : index
    %c0_10 = arith.constant 0 : index
    %c0_11 = arith.constant 0 : index
    %17 = vector.load %arg3[%c0_8, %c1_9, %c0_10, %c0_11] : memref<2x3x16x16xf32, #tpu.memory_space<vmem>>, vector<2x1x16x16xf32>
    %18 = vector.shape_cast %17 : vector<2x1x16x16xf32> to vector<2x16x16xf32>
    %c0_12 = arith.constant 0 : index
    %c2 = arith.constant 2 : index
    %c0_13 = arith.constant 0 : index
    %c0_14 = arith.constant 0 : index
    %19 = vector.load %arg3[%c0_12, %c2, %c0_13, %c0_14] : memref<2x3x16x16xf32, #tpu.memory_space<vmem>>, vector<2x1x16x16xf32>
    %20 = vector.shape_cast %19 : vector<2x1x16x16xf32> to vector<2x16x16xf32>
    %21 = vector.shape_cast %9 : vector<1x1x16xi1> to vector<1x1x16xi1>
    %22 = vector.broadcast %21 : vector<1x1x16xi1> to vector<2x16x16xi1>
    %23 = arith.select %22, %18, %20 : vector<2x16x16xi1>, vector<2x16x16xf32>
    %24 = vector.shape_cast %5 : vector<1x16x1xi1> to vector<1x16x1xi1>
    %25 = vector.broadcast %24 : vector<1x16x1xi1> to vector<2x16x16xi1>
    %26 = arith.select %25, %16, %23 : vector<2x16x16xi1>, vector<2x16x16xf32>
    %c0_15 = arith.constant 0 : index
    %c0_16 = arith.constant 0 : index
    %c0_17 = arith.constant 0 : index
    %c0_18 = arith.constant 0 : index
    %27 = vector.load %arg4[%c0_15, %c0_16, %c0_17, %c0_18] : memref<2x1x16x16xf32, #tpu.memory_space<vmem>>, vector<2x1x16x16xf32>
    %28 = vector.shape_cast %27 : vector<2x1x16x16xf32> to vector<2x16x16xf32>
    %29 = vector.shape_cast %26 : vector<2x16x16xf32> to vector<2x1x16x16xf32>
    tpu.vector_store %arg4[%c0_15, %c0_16, %c0_17, %c0_18], %29 {strides = array<i32>} : memref<2x1x16x16xf32, #tpu.memory_space<vmem>>, vector<2x1x16x16xf32>,
    return
  }
  func.func @transform_0(%arg0: i32, %arg1: i32, %arg2: i32) -> (i32, i32, i32, i32) {
    %c0_i32 = arith.constant 0 : i32
    %c0_i32_0 = arith.constant 0 : i32
    return %arg0, %c0_i32, %arg1, %arg2 : i32, i32, i32, i32
  }
  func.func @transform_1(%arg0: i32, %arg1: i32, %arg2: i32) -> (i32, i32, i32, i32) {
    %c0_i32 = arith.constant 0 : i32
    %c0_i32_0 = arith.constant 0 : i32
    return %arg0, %c0_i32, %arg1, %arg2 : i32, i32, i32, i32
  }
}

</mosaic_0001>

<llo_original>
// kernel: tpu_custom_call.1
$region0: #{tpu_custom_call.1}
  #allocation0 [shape = 'u32[]', space=smem, size = 0x4, offset = 0x4, fixed_abs, tag = 'smem constant byte address 0x4 - core index']
  #allocation1 [shape = 'u32[144,128]{1,0:T(1,128)}', space=vmem, size = 0x12000, scoped, tag = 'internal scratch']
  %s0 = inlined_call_operand.hbm [shape: f32[2,3,16,16], index: 0, kind: input, shape index: {}]
  %s1 = inlined_call_operand.hbm [shape: f32[2,1,16,16], index: 1, kind: output, shape index: {}]
  %s2 = sld [smem:[#allocation0]]
  $region18: #{tpu_custom_call.1} parent=0
    _
  %s4 = ssub.s32 1, %s2
  %s5 = scalar_select 0, %s4, %s2
  $region1: #{tpu_custom_call.1} parent=0
    #allocation2 [shape = 'u8[49152]{0}', space=vmem, size = 0xc000, scoped, tag = 'input window, operand 0, single buffered']
    #allocation3 [shape = 's32[1]{0}', space=sflag, size = 0x4, scoped, tag = 'scoped memory for tpu_custom_call.1']
    #allocation4 [shape = 's32[1]{0}', space=sflag, size = 0x4, scoped, tag = 'scoped memory for tpu_custom_call.1']
    #allocation5 [shape = 'u8[16384]{0}', space=vmem, size = 0x4000, scoped, tag = 'output window, operand 0, single buffered']
    %6 = vsyncpa [#allocation3], 0
    %7 = vsyncpa [#allocation4], 0
    // Predicated region
    $region2: #{tpu_custom_call.1} parent=1 // pred_check
      _
    $region3: #{tpu_custom_call.1} parent=1 // pred_check_branch
      %9 = sbr.rel (0) target = $region5
    $region4: #{tpu_custom_call.1} parent=1 // pred_region
      %s11 = ssub.s32 1536, 1536
      %12 = vsyncadd [#allocation3], %s11
      %s13 = sshll.u32 [#allocation2], 4
      %s14 = int_to_ptr.vmem [resolvable:$true] %s13
      %19 = dma.hbm_to_vmem [thread:$0]  %s0, 1536, %s14, [#allocation3], 128, 128, 8
    $region5: #{tpu_custom_call.1} parent=1 // pred_fallthru
      _
    // Predicated region
    $region6: #{tpu_custom_call.1} parent=1 // pred_check
      _
    $region7: #{tpu_custom_call.1} parent=1 // pred_check_branch
      %21 = sbr.rel (0) target = $region9
    $region8: #{tpu_custom_call.1} parent=1 // pred_region
      %22 = dma.done [#allocation3], 1536
    $region9: #{tpu_custom_call.1} parent=1 // pred_fallthru
      _
    %v23 = vlaneseq
    %v24 = vshrl.u32 %v23, 7
    %v25 = vadd.s32 %v24, 8
    %v26 = vlaneseq
    %v27 = vand.u32 %v26, 127
    %v28 = vand.u32 %v24, 1
    %v29 = vand.u32 %v25, 1
    %vm30 = vcmp.eq.s32.totalorder %v28, 0
    %vm31 = vcmp.eq.s32.totalorder %v29, 0
    %v32 = vand.u32 %v27, 1
    %vm33 = vcmp.eq.s32.totalorder %v32, 0
    %v34 = vld [vmem:[#allocation2] sm:$0xff]
    %v35 = vld [vmem:[#allocation2 + $0x8] sm:$0xff]
    %v36 = vld [vmem:[#allocation2 + $0x30] sm:$0xff]
    %v37 = vld [vmem:[#allocation2 + $0x38] sm:$0xff]
    %s38 = scalar_lea.vmem [#allocation2], 16
    %v39 = vld [vmem:[%s38] sm:$0xff]
    %v40 = vld [vmem:[%s38 + $0x8] sm:$0xff]
    %v41 = vld [vmem:[%s38 + $0x30] sm:$0xff]
    %v42 = vld [vmem:[%s38 + $0x38] sm:$0xff]
    %v43 = vsel %vm33, 1, 0
    %vm44 = vcmp.eq.s32.totalorder %v43, 1
    %v45 = vsel %vm44, %v34, %v39
    %v46 = vsel %vm44, %v35, %v40
    %v47 = vsel %vm44, %v36, %v41
    %v48 = vsel %vm44, %v37, %v42
    %s49 = scalar_lea.vmem [#allocation2], 32
    %v50 = vld [vmem:[%s49] sm:$0xff]
    %v51 = vld [vmem:[%s49 + $0x8] sm:$0xff]
    %v52 = vld [vmem:[%s49 + $0x30] sm:$0xff]
    %v53 = vld [vmem:[%s49 + $0x38] sm:$0xff]
    %v54 = vsel %vm44, %v39, %v50
    %v55 = vsel %vm44, %v40, %v51
    %v56 = vsel %vm44, %v41, %v52
    %v57 = vsel %vm44, %v42, %v53
    %v58 = vsel %vm30, 1, 0
    %v59 = vsel %vm31, 1, 0
    %vm60 = vcmp.eq.s32.totalorder %v58, 1
    %vm61 = vcmp.eq.s32.totalorder %v59, 1
    %v62 = vsel %vm60, %v45, %v54
    %v63 = vsel %vm61, %v46, %v55
    %v64 = vsel %vm60, %v47, %v56
    %v65 = vsel %vm61, %v48, %v57
    %vm66 = vcmask 130048
    %67 = vst.msk [vmem:[#allocation5] sm:$0xff] %vm66, %v62
    %68 = vst.msk [vmem:[#allocation5 + $0x8] sm:$0xff] %vm66, %v63
    %69 = vst.msk [vmem:[#allocation5 + $0x10] sm:$0xff] %vm66, %v64
    %70 = vst.msk [vmem:[#allocation5 + $0x18] sm:$0xff] %vm66, %v65
    // Predicated region
    $region10: #{tpu_custom_call.1} parent=1 // pred_check
      _
    $region11: #{tpu_custom_call.1} parent=1 // pred_check_branch
      %72 = sbr.rel (0) target = $region13
    $region12: #{tpu_custom_call.1} parent=1 // pred_region
      %s74 = ssub.s32 512, 512
      %75 = vsyncadd [#allocation4], %s74
      %s76 = sshll.u32 [#allocation5], 4
      %s77 = int_to_ptr.vmem [resolvable:$true] %s76
      %82 = dma.vmem_to_hbm [thread:$0]  %s77, 512, %s1, [#allocation4], 128, 128, 8
    $region13: #{tpu_custom_call.1} parent=1 // pred_fallthru
      _
    // Predicated region
    $region14: #{tpu_custom_call.1} parent=1 // pred_check
      _
    $region15: #{tpu_custom_call.1} parent=1 // pred_check_branch
      %84 = sbr.rel (0) target = $region17
    $region16: #{tpu_custom_call.1} parent=1 // pred_region
      %85 = dma.done [#allocation4], 512
    $region17: #{tpu_custom_call.1} parent=1 // pred_fallthru
      _
    %86 = vsyncpa [#allocation3], 1
    %87 = vsyncpa [#allocation4], 1

</llo_original>
